<compile_context>
chip_gen: v6e
topology: v6e:2x2x1
jax: 0.10.0
libtpu: 0.0.40
codegen_flags: <defaults>
</compile_context>

<pallas_src>
import functools
import math

import jax
import jax.numpy as jnp
from jax.experimental import pallas as pl
from jax.experimental.pallas import tpu as pltpu


def _round_up(n, m):
    return ((n + m - 1) // m) * m


def _fold_mlp_kernel(x_ref, w1_ref, b1_ref, w2_ref, b2_ref, o_ref):
    # In-kernel cast of the streamed tile (no-op on the f32 path, cheap VPU
    # work hidden under the MXU on the bf16 path).
    x = x_ref[...].astype(w1_ref.dtype)
    # First linear: [TB, F] @ [F, Hp] -> [TB, Hp] on the MXU, f32 accumulation.
    h = jnp.dot(x, w1_ref[...], preferred_element_type=jnp.float32)
    h = jnp.maximum(h + b1_ref[...], 0.0)          # bias + ReLU in f32 (VPU)
    # Second linear: [TB, Hp] @ [Hp, Cp] -> [TB, Cp], f32 accumulation.
    y = jnp.dot(h.astype(w2_ref.dtype), w2_ref[...],
                preferred_element_type=jnp.float32)
    o_ref[...] = (y + b2_ref[...]).astype(o_ref.dtype)


@functools.partial(
    jax.jit,
    static_argnames=("block_b", "compute_dtype", "vmem_ceiling_bytes"))
def fold_classifier_forward(x, w1, b1, w2, b2, *, block_b=512,
                            compute_dtype=None,
                            vmem_ceiling_bytes=40 * 1024 * 1024):
    """Fused MLP forward: ReLU(x @ w1.T + b1) @ w2.T + b2.

    x:  [B, F]   activations (streamed from HBM in their stored dtype)
    w1: [H, F]   PyTorch nn.Linear layout (H = F // 4)
    b1: [H]
    w2: [C, H]
    b2: [C]
    Returns [B, C] in x.dtype.

    compute_dtype sets the MXU operand dtype (accumulation is always f32).
    Default x.dtype matches the f32 PyTorch reference bit-closely; on v6e/v7x
    pass jnp.bfloat16 (halves weight VMEM/HBM bytes, much higher MXU
    throughput) and use a ~1e-2 tolerance.
    """
    B, F = x.shape
    H = w1.shape[0]
    C = w2.shape[0]

    if compute_dtype is None:
        compute_dtype = x.dtype
    compute_dtype = jnp.dtype(compute_dtype)

    # Pad only the small weight/bias lane axes to multiples of 128 so every
    # VPU op and the final store are lane-dense.  Zero-padded b1 keeps padded
    # hidden lanes at exactly 0 after ReLU; zero-padded w2 keeps padded class
    # lanes from ever touching real outputs.
    H_pad = _round_up(H, 128)
    C_pad = _round_up(C, 128)

    # Pre-transpose + zero-pad weights once in XLA (layout plumbing only).
    w1_t = jnp.zeros((F, H_pad), compute_dtype).at[:, :H].set(
        w1.T.astype(compute_dtype))
    w2_t = jnp.zeros((H_pad, C_pad), compute_dtype).at[:H, :C].set(
        w2.T.astype(compute_dtype))
    b1_p = jnp.zeros((1, H_pad), jnp.float32).at[0, :H].set(
        b1.astype(jnp.float32))
    b2_p = jnp.zeros((1, C_pad), jnp.float32).at[0, :C].set(
        b2.astype(jnp.float32))

    x_bytes = jnp.dtype(x.dtype).itemsize
    w_bytes = compute_dtype.itemsize
    out_bytes = jnp.dtype(x.dtype).itemsize

    def vmem_bytes(tb):
        return (2 * tb * F * x_bytes            # x stream (double-buffered)
                + tb * F * w_bytes              # in-kernel cast copy of x
                + F * H_pad * w_bytes           # w1 (single-buffered, resident)
                + H_pad * C_pad * w_bytes       # w2 (resident)
                + (H_pad + C_pad) * 4           # biases
                + tb * H_pad * 4                # hidden f32 intermediate
                + tb * C_pad * 4                # f32 output intermediate
                + 2 * tb * C_pad * out_bytes)   # out stream (double-buffered)

    # Batch tile: the full batch if it fits in one tile (block dim == array
    # dim is always legal), otherwise a multiple of 8 rows.  Shrink (keeping
    # multiples of 8) until the VMEM budget fits the per-generation ceiling.
    if B <= block_b:
        tile_b = B
    else:
        tile_b = max(8, (block_b // 8) * 8)
    while tile_b > 8 and vmem_bytes(tile_b) > vmem_ceiling_bytes:
        tile_b = max(8, ((tile_b // 2) // 8) * 8)

    grid = (pl.cdiv(B, tile_b),)

    vmem_limit = min(max(int(vmem_bytes(tile_b) * 1.25), 32 * 1024 * 1024),
                     128 * 1024 * 1024)

    cost = pl.CostEstimate(
        flops=2 * B * (F * H + H * C),
        transcendentals=0,
        bytes_accessed=(B * F * x_bytes + F * H_pad * w_bytes
                        + H_pad * C_pad * w_bytes + B * C_pad * out_bytes),
    )

    const = pl.Buffered(1)   # grid-invariant blocks: single VMEM buffer

    out = pl.pallas_call(
        _fold_mlp_kernel,
        out_shape=jax.ShapeDtypeStruct((B, C_pad), x.dtype),
        grid=grid,
        in_specs=[
            # x: streamed per batch tile (double-buffered by the pipeline);
            # last dim is the full, unpadded F.
            pl.BlockSpec((tile_b, F), lambda i: (i, 0)),
            # Weights / biases: full-array, VMEM-resident, single-buffered.
            pl.BlockSpec((F, H_pad), lambda i: (0, 0), pipeline_mode=const),
            pl.BlockSpec((1, H_pad), lambda i: (0, 0), pipeline_mode=const),
            pl.BlockSpec((H_pad, C_pad), lambda i: (0, 0), pipeline_mode=const),
            pl.BlockSpec((1, C_pad), lambda i: (0, 0), pipeline_mode=const),
        ],
        out_specs=pl.BlockSpec((tile_b, C_pad), lambda i: (i, 0)),
        compiler_params=pltpu.CompilerParams(
            # Independent batch tiles -> shard across TCs on v7x.
            dimension_semantics=("parallel",),
            vmem_limit_bytes=vmem_limit,
        ),
        cost_estimate=cost,
    )(x, w1_t, b1_p, w2_t, b2_p)

    # TODO(synk): add a K-tiled (F-blocked, 2-D grid, hidden-accumulator) path
    # for very large F where even the bf16 w1 [F, H_pad] does not fit v7x's
    # 64 MiB per-TC VMEM.

    # Strip class padding (no batch padding was ever materialized).
    return out[:, :C]


def init_fold_classifier_params(key, in_features, n_classes, dtype=jnp.float32):
    """Deterministic init mimicking PyTorch nn.Linear defaults."""
    hidden = in_features // 4
    k1, k2, k3, k4 = jax.random.split(key, 4)

    bound1 = 1.0 / math.sqrt(in_features)
    w1 = jax.random.uniform(k1, (hidden, in_features), dtype, -bound1, bound1)
    b1 = jax.random.uniform(k2, (hidden,), dtype, -bound1, bound1)

    bound2 = 1.0 / math.sqrt(hidden)
    w2 = jax.random.uniform(k3, (n_classes, hidden), dtype, -bound2, bound2)
    b2 = jax.random.uniform(k4, (n_classes,), dtype, -bound2, bound2)
    return w1, b1, w2, b2


def _reference_forward(x, w1, b1, w2, b2):
    h = jnp.maximum(x @ w1.T + b1, 0.0)
    return h @ w2.T + b2


if __name__ == "__main__":
    key = jax.random.PRNGKey(0)
    kx, kp = jax.random.split(key)

    # Small, deliberately non-128-aligned shapes to exercise padding/masking.
    batch = 6
    in_features = 96          # hidden = 24
    n_classes = 5

    x = jax.random.normal(kx, (batch, in_features), jnp.float32)
    w1, b1, w2, b2 = init_fold_classifier_params(kp, in_features, n_classes)
    y_ref = _reference_forward(x, w1, b1, w2, b2)

    # f32 path: bit-close to the PyTorch reference.
    y = jax.block_until_ready(fold_classifier_forward(x, w1, b1, w2, b2))
    assert y.shape == (batch, n_classes)
    assert jnp.allclose(y, y_ref, atol=1e-5, rtol=1e-5), (
        float(jnp.max(jnp.abs(y - y_ref))))

    # bf16-MXU path (recommended default on v6e/v7x): looser tolerance.
    y_bf16 = jax.block_until_ready(
        fold_classifier_forward(x, w1, b1, w2, b2,
                                compute_dtype=jnp.bfloat16))
    assert jnp.allclose(y_bf16, y_ref, atol=5e-2, rtol=5e-2), (
        float(jnp.max(jnp.abs(y_bf16 - y_ref))))

    # Ragged multi-tile batch (B not a multiple of the tile): exercises masked
    # final-tile stores with no wrapper-side padding of x.
    x2 = jax.random.normal(kx, (70, in_features), jnp.float32)
    y2 = jax.block_until_ready(
        fold_classifier_forward(x2, w1, b1, w2, b2, block_b=32))
    y2_ref = _reference_forward(x2, w1, b1, w2, b2)
    assert y2.shape == (70, n_classes)
    assert jnp.allclose(y2, y2_ref, atol=1e-5, rtol=1e-5), (
        float(jnp.max(jnp.abs(y2 - y2_ref))))

    print("KERNEL_OK")
</pallas_src>

<mosaic_0001>
module attributes {stable_mosaic.version = 11 : i64} {
  func.func @_fold_mlp_kernel(%arg0: i32, %arg1: memref<6x96xf32, #tpu.memory_space<vmem>>, %arg2: memref<96x128xf32, #tpu.memory_space<vmem>>, %arg3: memref<1x128xf32, #tpu.memory_space<vmem>>, %arg4: memref<128x128xf32, #tpu.memory_space<vmem>>, %arg5: memref<1x128xf32, #tpu.memory_space<vmem>>, %arg6: memref<6x128xf32, #tpu.memory_space<vmem>>) attributes {dimension_semantics = [#tpu.dimension_semantics<parallel>], iteration_bounds = array<i64: 1>, scalar_prefetch = 0 : i64, scratch_operands = 0 : i64, tpu.core_type = #tpu.core_type<tc>, window_params = [{transform_indices = @transform_0, window_bounds = array<i64: 6, 96>}, {pipeline_mode = #tpu.pipeline_mode<synchronous>, transform_indices = @transform_1, window_bounds = array<i64: 96, 128>}, {pipeline_mode = #tpu.pipeline_mode<synchronous>, transform_indices = @transform_2, window_bounds = array<i64: 1, 128>}, {pipeline_mode = #tpu.pipeline_mode<synchronous>, transform_indices = @transform_3, window_bounds = array<i64: 128, 128>}, {pipeline_mode = #tpu.pipeline_mode<synchronous>, transform_indices = @transform_4, window_bounds = array<i64: 1, 128>}, {transform_indices = @transform_5, window_bounds = array<i64: 6, 128>}]} {
    %c0 = arith.constant 0 : index
    %c0_0 = arith.constant 0 : index
    %0 = vector.load %arg1[%c0, %c0_0] : memref<6x96xf32, #tpu.memory_space<vmem>>, vector<6x96xf32>
    %c0_1 = arith.constant 0 : index
    %c0_2 = arith.constant 0 : index
    %1 = vector.load %arg2[%c0_1, %c0_2] : memref<96x128xf32, #tpu.memory_space<vmem>>, vector<96x128xf32>
    %cst = arith.constant dense<0.000000e+00> : vector<6x128xf32>
    %2 = tpu.matmul %0, %1, %cst {dimension_numbers = #tpu.dot_dimension_numbers<[1], [0], [0], [1], [0, 0, 1, 1], [], []>} : vector<6x96xf32>, vector<96x128xf32>, vector<6x128xf32> -> vector<6x128xf32>
    %c0_3 = arith.constant 0 : index
    %c0_4 = arith.constant 0 : index
    %3 = vector.load %arg3[%c0_3, %c0_4] : memref<1x128xf32, #tpu.memory_space<vmem>>, vector<1x128xf32>
    %4 = vector.broadcast %3 : vector<1x128xf32> to vector<6x128xf32>
    %5 = arith.addf %2, %4 : vector<6x128xf32>
    %cst_5 = arith.constant 0.000000e+00 : f32
    %6 = vector.broadcast %cst_5 : f32 to vector<6x128xf32>
    %7 = arith.maximumf %5, %6 : vector<6x128xf32>
    %c0_6 = arith.constant 0 : index
    %c0_7 = arith.constant 0 : index
    %8 = vector.load %arg4[%c0_6, %c0_7] : memref<128x128xf32, #tpu.memory_space<vmem>>, vector<128x128xf32>
    %cst_8 = arith.constant dense<0.000000e+00> : vector<6x128xf32>
    %9 = tpu.matmul %7, %8, %cst_8 {dimension_numbers = #tpu.dot_dimension_numbers<[1], [0], [0], [1], [0, 0, 1, 1], [], []>} : vector<6x128xf32>, vector<128x128xf32>, vector<6x128xf32> -> vector<6x128xf32>
    %c0_9 = arith.constant 0 : index
    %c0_10 = arith.constant 0 : index
    %10 = vector.load %arg5[%c0_9, %c0_10] : memref<1x128xf32, #tpu.memory_space<vmem>>, vector<1x128xf32>
    %11 = vector.broadcast %10 : vector<1x128xf32> to vector<6x128xf32>
    %12 = arith.addf %9, %11 : vector<6x128xf32>
    %c0_11 = arith.constant 0 : index
    %c0_12 = arith.constant 0 : index
    %13 = vector.load %arg6[%c0_11, %c0_12] : memref<6x128xf32, #tpu.memory_space<vmem>>, vector<6x128xf32>
    tpu.vector_store %arg6[%c0_11, %c0_12], %12 {strides = array<i32>} : memref<6x128xf32, #tpu.memory_space<vmem>>, vector<6x128xf32>,
    return
  }
  func.func @transform_0(%arg0: i32) -> (i32, i32) {
    %c0_i32 = arith.constant 0 : i32
    %c0_i32_0 = arith.constant 0 : i32
    return %arg0, %c0_i32 : i32, i32
  }
  func.func @transform_1(%arg0: i32) -> (i32, i32) {
    %c0_i32 = arith.constant 0 : i32
    %c0_i32_0 = arith.constant 0 : i32
    %c0_i32_1 = arith.constant 0 : i32
    return %c0_i32, %c0_i32_0 : i32, i32
  }
  func.func @transform_2(%arg0: i32) -> (i32, i32) {
    %c0_i32 = arith.constant 0 : i32
    %c0_i32_0 = arith.constant 0 : i32
    %c0_i32_1 = arith.constant 0 : i32
    return %c0_i32, %c0_i32_0 : i32, i32
  }
  func.func @transform_3(%arg0: i32) -> (i32, i32) {
    %c0_i32 = arith.constant 0 : i32
    %c0_i32_0 = arith.constant 0 : i32
    %c0_i32_1 = arith.constant 0 : i32
    return %c0_i32, %c0_i32_0 : i32, i32
  }
  func.func @transform_4(%arg0: i32) -> (i32, i32) {
    %c0_i32 = arith.constant 0 : i32
    %c0_i32_0 = arith.constant 0 : i32
    %c0_i32_1 = arith.constant 0 : i32
    return %c0_i32, %c0_i32_0 : i32, i32
  }
  func.func @transform_5(%arg0: i32) -> (i32, i32) {
    %c0_i32 = arith.constant 0 : i32
    %c0_i32_0 = arith.constant 0 : i32
    return %arg0, %c0_i32 : i32, i32
  }
}

</mosaic_0001>

<llo_original>
// kernel: fold_classifier_forward.1
$region0: #{fold_classifier_forward.1}
  #allocation0 [shape = 'u32[]', space=smem, size = 0x4, offset = 0x4, fixed_abs, tag = 'smem constant byte address 0x4 - core index']
  #allocation1 [shape = 'u32[144,128]{1,0:T(1,128)}', space=vmem, size = 0x12000, scoped, tag = 'internal scratch']
  %s0 = inlined_call_operand.vmem [shape: f32[6,96], index: 0, kind: input, shape index: {}]
  %s1 = inlined_call_operand.vmem [shape: f32[96,128], index: 1, kind: input, shape index: {}]
  %s2 = inlined_call_operand.vmem [shape: f32[1,128], index: 2, kind: input, shape index: {}]
  %s3 = inlined_call_operand.vmem [shape: f32[128,128], index: 3, kind: input, shape index: {}]
  %s4 = inlined_call_operand.vmem [shape: f32[1,128], index: 4, kind: input, shape index: {}]
  %s5 = inlined_call_operand.hbm [shape: f32[6,128], index: 5, kind: output, shape index: {}]
  %s6 = sld [smem:[#allocation0]]
  $region30: #{fold_classifier_forward.1} parent=0
    _
  %s8 = ssub.s32 1, %s6
  %s9 = scalar_select 0, %s8, %s6
  $region1: #{fold_classifier_forward.1} parent=0
    #allocation2 [shape = 'u8[4096]{0}', space=vmem, size = 0x1000, scoped, tag = 'output window, operand 0, single buffered']
    #allocation3 [shape = 's32[1]{0}', space=sflag, size = 0x4, scoped, tag = 'scoped memory for fold_classifier_forward.1']
    %10 = vsyncpa [#allocation3], 0
    // Predicated region
    $region2: #{fold_classifier_forward.1} parent=1 // pred_check
      _
    $region3: #{fold_classifier_forward.1} parent=1 // pred_check_branch
      %12 = sbr.rel (0) target = $region5
    $region4: #{fold_classifier_forward.1} parent=1 // pred_region
      _
    $region5: #{fold_classifier_forward.1} parent=1 // pred_fallthru
      _
    // Predicated region
    $region6: #{fold_classifier_forward.1} parent=1 // pred_check
      _
    $region7: #{fold_classifier_forward.1} parent=1 // pred_check_branch
      %14 = sbr.rel (0) target = $region9
    $region8: #{fold_classifier_forward.1} parent=1 // pred_region
      _
    $region9: #{fold_classifier_forward.1} parent=1 // pred_fallthru
      _
    // Predicated region
    $region10: #{fold_classifier_forward.1} parent=1 // pred_check
      _
    $region11: #{fold_classifier_forward.1} parent=1 // pred_check_branch
      %16 = sbr.rel (0) target = $region13
    $region12: #{fold_classifier_forward.1} parent=1 // pred_region
      _
    $region13: #{fold_classifier_forward.1} parent=1 // pred_fallthru
      _
    // Predicated region
    $region14: #{fold_classifier_forward.1} parent=1 // pred_check
      _
    $region15: #{fold_classifier_forward.1} parent=1 // pred_check_branch
      %18 = sbr.rel (0) target = $region17
    $region16: #{fold_classifier_forward.1} parent=1 // pred_region
      _
    $region17: #{fold_classifier_forward.1} parent=1 // pred_fallthru
      _
    // Predicated region
    $region18: #{fold_classifier_forward.1} parent=1 // pred_check
      _
    $region19: #{fold_classifier_forward.1} parent=1 // pred_check_branch
      %20 = sbr.rel (0) target = $region21
    $region20: #{fold_classifier_forward.1} parent=1 // pred_region
      _
    $region21: #{fold_classifier_forward.1} parent=1 // pred_fallthru
      _
    %v21 = vld [vmem:[%s0] sm:$0x3f]
    %v22 = vld [vmem:[%s1] sm:$0xff]
    %v23 = vld [vmem:[%s1 + $0x8] sm:$0xff]
    %v24 = vld [vmem:[%s1 + $0x10] sm:$0xff]
    %v25 = vld [vmem:[%s1 + $0x18] sm:$0xff]
    %v26 = vld [vmem:[%s1 + $0x20] sm:$0xff]
    %v27 = vld [vmem:[%s1 + $0x28] sm:$0xff]
    %v28 = vld [vmem:[%s1 + $0x30] sm:$0xff]
    %v29 = vld [vmem:[%s1 + $0x38] sm:$0xff]
    %v30 = vld [vmem:[%s1 + $0x40] sm:$0xff]
    %v31 = vld [vmem:[%s1 + $0x48] sm:$0xff]
    %v32 = vld [vmem:[%s1 + $0x50] sm:$0xff]
    %v33 = vld [vmem:[%s1 + $0x58] sm:$0xff]
    %v34 = vld [vmem:[%s2] sm:$0x1]
    %v36 = vlaneseq
    %v37 = vshrl.u32 %v36, 7
    %v38 = vsub.s32 0, %v37
    %v39 = vrot.slane %v34, %v38
    %vm41 = vcmask 785408
    %v43 = vsel %vm41, %v21, 0
    %45 = vmatprep.subr.mxu0 0.0
    %46 = vmatpush1.msra.mxu0 0.0
    %47 = vmatprep.subr.mxu0 0.0
    %48 = vmatpush1.msra.mxu0 0.0
    %49 = vmatprep.subr.mxu0 0.0
    %50 = vmatpush1.msra.mxu0 0.0
    %51 = vmatprep.subr.mxu0 0.0
    %52 = vmatpush1.msra.mxu0 0.0
    %53 = vmatprep.subr.mxu0 0.0
    %54 = vmatpush1.msra.mxu0 %v33
    %55 = vmatprep.subr.mxu0 0.0
    %56 = vmatpush1.msra.mxu0 %v32
    %57 = vmatprep.subr.mxu0 0.0
    %58 = vmatpush1.msra.mxu0 %v31
    %59 = vmatprep.subr.mxu0 0.0
    %60 = vmatpush1.msra.mxu0 %v30
    %61 = vmatprep.subr.mxu0 0.0
    %62 = vmatpush1.msra.mxu0 %v29
    %63 = vmatprep.subr.mxu0 0.0
    %64 = vmatpush1.msra.mxu0 %v28
    %65 = vmatprep.subr.mxu0 0.0
    %66 = vmatpush1.msra.mxu0 %v27
    %67 = vmatprep.subr.mxu0 0.0
    %68 = vmatpush1.msra.mxu0 %v26
    %69 = vmatprep.subr.mxu0 0.0
    %70 = vmatpush1.msra.mxu0 %v25
    %71 = vmatprep.subr.mxu0 0.0
    %72 = vmatpush1.msra.mxu0 %v24
    %73 = vmatprep.subr.mxu0 0.0
    %74 = vmatpush1.msra.mxu0 %v23
    %75 = vmatprep.subr.mxu0 0.0
    %76 = vmatpush1.msra.mxu0 %v22
    %77 = vmatprep.subr.mxu0 0.0
    %78 = vmatpush2.msra.mxu0 0.0
    %79 = vmatprep.subr.mxu0 0.0
    %80 = vmatpush2.msra.mxu0 0.0
    %81 = vmatprep.subr.mxu0 0.0
    %82 = vmatpush2.msra.mxu0 0.0
    %83 = vmatprep.subr.mxu0 0.0
    %84 = vmatpush2.msra.mxu0 0.0
    %85 = vmatprep.subr.mxu0 0.0
    %86 = vmatpush2.msra.mxu0 0.0
    %87 = vmatprep.subr.mxu0 0.0
    %88 = vmatpush2.msra.mxu0 0.0
    %89 = vmatprep.subr.mxu0 0.0
    %90 = vmatpush2.msra.mxu0 0.0
    %91 = vmatprep.subr.mxu0 0.0
    %92 = vmatpush2.msra.mxu0 0.0
    %93 = vmatprep.subr.mxu0 0.0
    %94 = vmatpush2.msra.mxu0 0.0
    %95 = vmatprep.subr.mxu0 0.0
    %96 = vmatpush2.msra.mxu0 0.0
    %97 = vmatprep.subr.mxu0 0.0
    %98 = vmatpush2.msra.mxu0 0.0
    %99 = vmatprep.subr.mxu0 0.0
    %100 = vmatpush2.msra.mxu0 0.0
    %101 = vmatprep.subr.mxu0 0.0
    %102 = vmatpush2.msra.mxu0 0.0
    %103 = vmatprep.subr.mxu0 0.0
    %104 = vmatpush2.msra.mxu0 0.0
    %105 = vmatprep.subr.mxu0 0.0
    %106 = vmatpush2.msra.mxu0 0.0
    %107 = vmatprep.subr.mxu0 0.0
    %108 = vmatpush2.msra.mxu0 0.0
    %109 = vmatprep.mubr.f32.mxu0 0.0
    %110 = vmatmul.mubr.f32.gmra.mxu0 %v43
    %v111 = vpop.f32.mrf.mxu0
    %v112 = vadd.f32 %v39, %v111
    %v113 = vpop.f32.mrf.mxu0
    %114 = vdwg.mxu0
    %v115 = vmax.f32 %v112, 0.0
    %v116 = vld [vmem:[%s3] sm:$0xff]
    %v117 = vld [vmem:[%s3 + $0x8] sm:$0xff]
    %v118 = vld [vmem:[%s3 + $0x10] sm:$0xff]
    %v119 = vld [vmem:[%s3 + $0x18] sm:$0xff]
    %v120 = vld [vmem:[%s3 + $0x20] sm:$0xff]
    %v121 = vld [vmem:[%s3 + $0x28] sm:$0xff]
    %v122 = vld [vmem:[%s3 + $0x30] sm:$0xff]
    %v123 = vld [vmem:[%s3 + $0x38] sm:$0xff]
    %v124 = vld [vmem:[%s3 + $0x40] sm:$0xff]
    %v125 = vld [vmem:[%s3 + $0x48] sm:$0xff]
    %v126 = vld [vmem:[%s3 + $0x50] sm:$0xff]
    %v127 = vld [vmem:[%s3 + $0x58] sm:$0xff]
    %v128 = vld [vmem:[%s3 + $0x60] sm:$0xff]
    %v129 = vld [vmem:[%s3 + $0x68] sm:$0xff]
    %v130 = vld [vmem:[%s3 + $0x70] sm:$0xff]
    %v131 = vld [vmem:[%s3 + $0x78] sm:$0xff]
    %v132 = vld [vmem:[%s4] sm:$0x1]
    %v134 = vlaneseq
    %v135 = vshrl.u32 %v134, 7
    %v136 = vsub.s32 0, %v135
    %v137 = vrot.slane %v132, %v136
    %139 = vmatprep.subr.mxu0 0.0
    %140 = vmatpush1.msra.mxu0 %v131
    %141 = vmatprep.subr.mxu0 0.0
    %142 = vmatpush1.msra.mxu0 %v130
    %143 = vmatprep.subr.mxu0 0.0
    %144 = vmatpush1.msra.mxu0 %v129
    %145 = vmatprep.subr.mxu0 0.0
    %146 = vmatpush1.msra.mxu0 %v128
    %147 = vmatprep.subr.mxu0 0.0
    %148 = vmatpush1.msra.mxu0 %v127
    %149 = vmatprep.subr.mxu0 0.0
    %150 = vmatpush1.msra.mxu0 %v126
    %151 = vmatprep.subr.mxu0 0.0
    %152 = vmatpush1.msra.mxu0 %v125
    %153 = vmatprep.subr.mxu0 0.0
    %154 = vmatpush1.msra.mxu0 %v124
    %155 = vmatprep.subr.mxu0 0.0
    %156 = vmatpush1.msra.mxu0 %v123
    %157 = vmatprep.subr.mxu0 0.0
    %158 = vmatpush1.msra.mxu0 %v122
    %159 = vmatprep.subr.mxu0 0.0
    %160 = vmatpush1.msra.mxu0 %v121
    %161 = vmatprep.subr.mxu0 0.0
    %162 = vmatpush1.msra.mxu0 %v120
    %163 = vmatprep.subr.mxu0 0.0
    %164 = vmatpush1.msra.mxu0 %v119
    %165 = vmatprep.subr.mxu0 0.0
    %166 = vmatpush1.msra.mxu0 %v118
    %167 = vmatprep.subr.mxu0 0.0
    %168 = vmatpush1.msra.mxu0 %v117
    %169 = vmatprep.subr.mxu0 0.0
    %170 = vmatpush1.msra.mxu0 %v116
    %171 = vmatprep.subr.mxu0 0.0
    %172 = vmatpush2.msra.mxu0 0.0
    %173 = vmatprep.subr.mxu0 0.0
    %174 = vmatpush2.msra.mxu0 0.0
    %175 = vmatprep.subr.mxu0 0.0
    %176 = vmatpush2.msra.mxu0 0.0
    %177 = vmatprep.subr.mxu0 0.0
    %178 = vmatpush2.msra.mxu0 0.0
    %179 = vmatprep.subr.mxu0 0.0
    %180 = vmatpush2.msra.mxu0 0.0
    %181 = vmatprep.subr.mxu0 0.0
    %182 = vmatpush2.msra.mxu0 0.0
    %183 = vmatprep.subr.mxu0 0.0
    %184 = vmatpush2.msra.mxu0 0.0
    %185 = vmatprep.subr.mxu0 0.0
    %186 = vmatpush2.msra.mxu0 0.0
    %187 = vmatprep.subr.mxu0 0.0
    %188 = vmatpush2.msra.mxu0 0.0
    %189 = vmatprep.subr.mxu0 0.0
    %190 = vmatpush2.msra.mxu0 0.0
    %191 = vmatprep.subr.mxu0 0.0
    %192 = vmatpush2.msra.mxu0 0.0
    %193 = vmatprep.subr.mxu0 0.0
    %194 = vmatpush2.msra.mxu0 0.0
    %195 = vmatprep.subr.mxu0 0.0
    %196 = vmatpush2.msra.mxu0 0.0
    %197 = vmatprep.subr.mxu0 0.0
    %198 = vmatpush2.msra.mxu0 0.0
    %199 = vmatprep.subr.mxu0 0.0
    %200 = vmatpush2.msra.mxu0 0.0
    %201 = vmatprep.subr.mxu0 0.0
    %202 = vmatpush2.msra.mxu0 0.0
    %203 = vmatprep.mubr.f32.mxu0 0.0
    %204 = vmatmul.mubr.f32.gmra.mxu0 %v115
    %v205 = vpop.f32.mrf.mxu0
    %v206 = vadd.f32 %v137, %v205
    %v207 = vpop.f32.mrf.mxu0
    %208 = vdwg.mxu0
    %209 = vst [vmem:[#allocation2] sm:$0x3f] %v206
    // Predicated region
    $region22: #{fold_classifier_forward.1} parent=1 // pred_check
      _
    $region23: #{fold_classifier_forward.1} parent=1 // pred_check_branch
      %211 = sbr.rel (0) target = $region25
    $region24: #{fold_classifier_forward.1} parent=1 // pred_region
      %s213 = ssub.s32 128, 128
      %214 = vsyncadd [#allocation3], %s213
      %s216 = sshll.u32 [#allocation2], 4
      %s217 = int_to_ptr.vmem [resolvable:$true] %s216
      %219 = dma.vmem_to_hbm [thread:$0]  %s217, 128, %s5, [#allocation3]
    $region25: #{fold_classifier_forward.1} parent=1 // pred_fallthru
      _
    // Predicated region
    $region26: #{fold_classifier_forward.1} parent=1 // pred_check
      _
    $region27: #{fold_classifier_forward.1} parent=1 // pred_check_branch
      %221 = sbr.rel (0) target = $region29
    $region28: #{fold_classifier_forward.1} parent=1 // pred_region
      %222 = dma.done [#allocation3], 128
    $region29: #{fold_classifier_forward.1} parent=1 // pred_fallthru
      _
    %223 = vsyncpa [#allocation3], 1

</llo_original>
